<compile_context>
chip_gen: v7x
topology: tpu7x:2x2x1
jax: 0.10.0
libtpu: 0.0.40
codegen_flags: <defaults>
</compile_context>

<pallas_src>
import functools

import numpy as np
import jax
import jax.numpy as jnp
from jax.experimental import pallas as pl
from jax.experimental.pallas import tpu as pltpu


def _clip_head_kernel(scale_ref, texts_ref, imgs_ref, lpi_ref, acc_ref, *, inv_s):
    # scale_ref: (1, 1) SMEM   -- exp(logit_scale), pre-exponentiated in wrapper
    # texts_ref: (Mp, C) VMEM  -- zero-padded text features, resident across grid
    # imgs_ref : (TN, TS, C)   -- one tile of the (N, S, C) image tensor
    # lpi_ref  : (TN, Mp)      -- logits_per_image tile (lane-dense in Mp)
    # acc_ref  : (TN, C) f32   -- pooled-sum accumulator (scratch)
    s_idx = pl.program_id(1)

    @pl.when(s_idx == 0)
    def _():
        acc_ref[...] = jnp.zeros_like(acc_ref)

    # Sum over the S (sublane) axis; C stays on lanes -> plain VPU accumulation.
    acc_ref[...] += jnp.sum(imgs_ref[...].astype(jnp.float32), axis=1)

    @pl.when(s_idx == pl.num_programs(1) - 1)
    def _():
        pooled = acc_ref[...] * inv_s                       # mean over true S -> (TN, C)

        # L2-normalize image features; fold exp(logit_scale) into them.
        # (The `where` only changes behaviour for exactly-zero rows, which are
        #  the zero padding rows; PyTorch would produce NaN there.)
        img_sq = jnp.sum(pooled * pooled, axis=-1, keepdims=True)
        img_inv = jnp.where(img_sq > 0.0, jax.lax.rsqrt(img_sq), 0.0)
        img_feat = pooled * (img_inv * scale_ref[0, 0])     # (TN, C)

        texts = texts_ref[...].astype(jnp.float32)          # (Mp, C)
        txt_sq = jnp.sum(texts * texts, axis=-1, keepdims=True)
        txt_inv = jnp.where(txt_sq > 0.0, jax.lax.rsqrt(txt_sq), 0.0)
        txt_feat = texts * txt_inv                          # (Mp, C)

        # (TN, C) x (Mp, C) contracting C -> (TN, Mp); no explicit .T needed.
        lpi = jax.lax.dot_general(
            img_feat, txt_feat,
            dimension_numbers=(((1,), (1,)), ((), ())),
            preferred_element_type=jnp.float32)
        lpi_ref[...] = lpi.astype(lpi_ref.dtype)


def clip_head_forward(imgs, texts, logit_scale_param, *, ts_target=512, tn=8):
    """imgs: (N, C, T, H, W); texts: (M, C); logit_scale_param: scalar (pre-exp).

    Returns (logits_per_image (N, M), logits_per_text (M, N))."""
    N, C = imgs.shape[0], imgs.shape[1]
    S = int(np.prod(imgs.shape[2:]))
    M = texts.shape[0]

    # (N, C, S) -> (N, S, C): pooling reduction on sublanes, C lane-dense.
    imgs_nsc = jnp.transpose(imgs.reshape(N, C, S), (0, 2, 1))

    # --- tile sizing -------------------------------------------------------
    # S tile: multiple of 8, capped both by ts_target and by a ~4 MiB block
    # budget (so a double-buffered imgs tile stays well inside scoped VMEM on
    # every generation, including v7x's smaller VMEM).
    ts_by_vmem = max(8, (4 * 1024 * 1024) // max(1, tn * C * 4))
    ts = max(8, (min(ts_target, ts_by_vmem) // 8) * 8)
    if S <= ts:
        ts = (-(-S // 8)) * 8                    # single S step, rounded to 8

    n_pad = (-N) % tn
    s_pad = (-S) % ts
    mp = max(128, (-(-M // 128)) * 128)          # lane-dense logits output
    m_pad = mp - M

    imgs_p = jnp.pad(imgs_nsc, ((0, n_pad), (0, s_pad), (0, 0)))
    texts_p = jnp.pad(texts, ((0, m_pad), (0, 0)))
    n_p, s_p = N + n_pad, S + s_pad

    # exp(logit_scale) computed once here, not per grid step inside the kernel.
    scale = jnp.exp(jnp.asarray(logit_scale_param, jnp.float32)).reshape(1, 1)

    kernel = functools.partial(_clip_head_kernel, inv_s=1.0 / float(S))
    grid = (n_p // tn, s_p // ts)

    lpi_full = pl.pallas_call(
        kernel,
        out_shape=jax.ShapeDtypeStruct((n_p, mp), jnp.float32),
        grid=grid,
        in_specs=[
            pl.BlockSpec(memory_space=pltpu.MemorySpace.SMEM),       # scale scalar
            pl.BlockSpec((mp, C), lambda n, s: (0, 0)),              # texts, VMEM-resident
            pl.BlockSpec((tn, ts, C), lambda n, s: (n, s, 0)),       # imgs tile
        ],
        out_specs=pl.BlockSpec((tn, mp), lambda n, s: (n, 0)),
        scratch_shapes=[pltpu.VMEM((tn, C), jnp.float32)],
        compiler_params=pltpu.CompilerParams(
            dimension_semantics=("parallel", "arbitrary")),
    )(scale, texts_p, imgs_p)

    lpi = lpi_full[:N, :M]
    # logits_per_text == logits_per_image.T exactly; no second MXU pass needed.
    lpt = lpi.T
    return lpi, lpt


def clip_head_reference(imgs, texts, logit_scale_param):
    """Plain-JAX reference mirroring the PyTorch forward."""
    N, C = imgs.shape[0], imgs.shape[1]
    pooled = jnp.mean(imgs.reshape(N, C, -1), axis=-1)
    img_feat = pooled / jnp.linalg.norm(pooled, axis=-1, keepdims=True)
    txt_feat = texts / jnp.linalg.norm(texts, axis=-1, keepdims=True)
    scale = jnp.exp(jnp.asarray(logit_scale_param, jnp.float32))
    return scale * img_feat @ txt_feat.T, scale * txt_feat @ img_feat.T


if __name__ == "__main__":
    # logit_scale init (logit_scale_pretrained=False branch of __init__).
    logit_scale_param = jnp.float32(np.log(1.0 / 0.07))
    # NOTE: nn.Dropout is defined in __init__ but never applied in forward(),
    # so it is intentionally omitted here.

    key = jax.random.PRNGKey(0)
    k1, k2, k3, k4 = jax.random.split(key, 4)

    # Case 1: small shapes, single S step.  N=4 clips, C=32, T=2, H=4, W=4, M=4 texts.
    imgs1 = jax.random.normal(k1, (4, 32, 2, 4, 4), dtype=jnp.float32)
    texts1 = jax.random.normal(k2, (4, 32), dtype=jnp.float32)
    lpi1, lpt1 = clip_head_forward(imgs1, texts1, logit_scale_param)
    jax.block_until_ready((lpi1, lpt1))
    ref_lpi1, ref_lpt1 = clip_head_reference(imgs1, texts1, logit_scale_param)
    np.testing.assert_allclose(np.asarray(lpi1), np.asarray(ref_lpi1), rtol=1e-5, atol=1e-4)
    np.testing.assert_allclose(np.asarray(lpt1), np.asarray(ref_lpt1), rtol=1e-5, atol=1e-4)

    # Case 2: larger S with a forced small S-tile to exercise the multi-step
    # accumulator path (grid over S > 1).  N=4, C=32, T=4, H=8, W=8 -> S=256, M=6.
    imgs2 = jax.random.normal(k3, (4, 32, 4, 8, 8), dtype=jnp.float32)
    texts2 = jax.random.normal(k4, (6, 32), dtype=jnp.float32)
    lpi2, lpt2 = clip_head_forward(imgs2, texts2, logit_scale_param, ts_target=64)
    jax.block_until_ready((lpi2, lpt2))
    ref_lpi2, ref_lpt2 = clip_head_reference(imgs2, texts2, logit_scale_param)
    np.testing.assert_allclose(np.asarray(lpi2), np.asarray(ref_lpi2), rtol=1e-5, atol=1e-4)
    np.testing.assert_allclose(np.asarray(lpt2), np.asarray(ref_lpt2), rtol=1e-5, atol=1e-4)

    print("KERNEL_OK")
</pallas_src>

<mosaic_0001>
module attributes {stable_mosaic.version = 11 : i64} {
  func.func @_clip_head_kernel(%arg0: i32, %arg1: i32, %arg2: memref<1x1xf32, #tpu.memory_space<smem>>, %arg3: memref<128x32xf32, #tpu.memory_space<vmem>>, %arg4: memref<8x32x32xf32, #tpu.memory_space<vmem>>, %arg5: memref<8x128xf32, #tpu.memory_space<vmem>>, %arg6: memref<8x32xf32, #tpu.memory_space<vmem>>) attributes {dimension_semantics = [#tpu.dimension_semantics<parallel>, #tpu.dimension_semantics<arbitrary>], iteration_bounds = array<i64: 1, 1>, scalar_prefetch = 0 : i64, scratch_operands = 1 : i64, tpu.core_type = #tpu.core_type<tc>, window_params = [{transform_indices = @transform_0, window_bounds = array<i64: 1, 1>}, {pipeline_mode = #tpu.pipeline_mode<synchronous>, transform_indices = @transform_1, window_bounds = array<i64: 128, 32>}, {transform_indices = @transform_2, window_bounds = array<i64: 8, 32, 32>}, {transform_indices = @transform_3, window_bounds = array<i64: 8, 128>}]} {
    %c0_i32 = arith.constant 0 : i32
    %0 = arith.cmpi eq, %arg1, %c0_i32 : i32
    %1 = arith.extui %0 : i1 to i32
    %c0_i32_0 = arith.constant 0 : i32
    %2 = arith.cmpi ne, %1, %c0_i32_0 : i32
    scf.if %2 {
      %cst_9 = arith.constant 0.000000e+00 : f32
      %11 = vector.broadcast %cst_9 : f32 to vector<8x32xf32>
      %c0_10 = arith.constant 0 : index
      %c0_11 = arith.constant 0 : index
      %12 = vector.load %arg6[%c0_10, %c0_11] : memref<8x32xf32, #tpu.memory_space<vmem>>, vector<8x32xf32>
      tpu.vector_store %arg6[%c0_10, %c0_11], %11 {strides = array<i32>} : memref<8x32xf32, #tpu.memory_space<vmem>>, vector<8x32xf32>,
    } else {
    }
    %c0 = arith.constant 0 : index
    %c0_1 = arith.constant 0 : index
    %3 = vector.load %arg6[%c0, %c0_1] : memref<8x32xf32, #tpu.memory_space<vmem>>, vector<8x32xf32>
    %c0_2 = arith.constant 0 : index
    %c0_3 = arith.constant 0 : index
    %c0_4 = arith.constant 0 : index
    %4 = vector.load %arg4[%c0_2, %c0_3, %c0_4] : memref<8x32x32xf32, #tpu.memory_space<vmem>>, vector<8x32x32xf32>
    %cst = arith.constant dense<0.000000e+00> : vector<8x32xf32>
    %5 = vector.multi_reduction <add>, %4, %cst [1] : vector<8x32x32xf32> to vector<8x32xf32>
    %6 = arith.addf %3, %5 : vector<8x32xf32>
    %c0_5 = arith.constant 0 : index
    %c0_6 = arith.constant 0 : index
    %7 = vector.load %arg6[%c0_5, %c0_6] : memref<8x32xf32, #tpu.memory_space<vmem>>, vector<8x32xf32>
    tpu.vector_store %arg6[%c0_5, %c0_6], %6 {strides = array<i32>} : memref<8x32xf32, #tpu.memory_space<vmem>>, vector<8x32xf32>,
    %c0_i32_7 = arith.constant 0 : i32
    %8 = arith.cmpi eq, %arg1, %c0_i32_7 : i32
    %9 = arith.extui %8 : i1 to i32
    %c0_i32_8 = arith.constant 0 : i32
    %10 = arith.cmpi ne, %9, %c0_i32_8 : i32
    scf.if %10 {
      %c0_9 = arith.constant 0 : index
      %c0_10 = arith.constant 0 : index
      %11 = vector.load %arg6[%c0_9, %c0_10] : memref<8x32xf32, #tpu.memory_space<vmem>>, vector<8x32xf32>
      %cst_11 = arith.constant 3.125000e-02 : f32
      %12 = vector.broadcast %cst_11 : f32 to vector<8x32xf32>
      %13 = arith.mulf %11, %12 : vector<8x32xf32>
      %14 = arith.mulf %13, %13 : vector<8x32xf32>
      %cst_12 = arith.constant dense<0.000000e+00> : vector<8xf32>
      %15 = vector.multi_reduction <add>, %14, %cst_12 [1] : vector<8x32xf32> to vector<8xf32>
      %16 = vector.shape_cast %15 : vector<8xf32> to vector<8x1xf32>
      %cst_13 = arith.constant 0.000000e+00 : f32
      %17 = vector.broadcast %cst_13 : f32 to vector<8x1xf32>
      %18 = arith.cmpf ogt, %16, %17 : vector<8x1xf32>
      %19 = math.rsqrt %16 : vector<8x1xf32>
      %cst_14 = arith.constant 0.000000e+00 : f32
      %20 = vector.broadcast %cst_14 : f32 to vector<8x1xf32>
      %21 = arith.select %18, %19, %20 : vector<8x1xi1>, vector<8x1xf32>
      %c0_15 = arith.constant 0 : index
      %c0_16 = arith.constant 0 : index
      %22 = memref.load %arg2[%c0_15, %c0_16] : memref<1x1xf32, #tpu.memory_space<smem>>
      %23 = vector.broadcast %22 : f32 to vector<8x1xf32>
      %24 = arith.mulf %21, %23 : vector<8x1xf32>
      %25 = vector.broadcast %24 : vector<8x1xf32> to vector<8x32xf32>
      %26 = arith.mulf %13, %25 : vector<8x32xf32>
      %c0_17 = arith.constant 0 : index
      %c0_18 = arith.constant 0 : index
      %27 = vector.load %arg3[%c0_17, %c0_18] : memref<128x32xf32, #tpu.memory_space<vmem>>, vector<128x32xf32>
      %28 = arith.mulf %27, %27 : vector<128x32xf32>
      %cst_19 = arith.constant dense<0.000000e+00> : vector<128xf32>
      %29 = vector.multi_reduction <add>, %28, %cst_19 [1] : vector<128x32xf32> to vector<128xf32>
      %30 = vector.shape_cast %29 : vector<128xf32> to vector<128x1xf32>
      %cst_20 = arith.constant 0.000000e+00 : f32
      %31 = vector.broadcast %cst_20 : f32 to vector<128x1xf32>
      %32 = arith.cmpf ogt, %30, %31 : vector<128x1xf32>
      %33 = math.rsqrt %30 : vector<128x1xf32>
      %cst_21 = arith.constant 0.000000e+00 : f32
      %34 = vector.broadcast %cst_21 : f32 to vector<128x1xf32>
      %35 = arith.select %32, %33, %34 : vector<128x1xi1>, vector<128x1xf32>
      %36 = vector.broadcast %35 : vector<128x1xf32> to vector<128x32xf32>
      %37 = arith.mulf %27, %36 : vector<128x32xf32>
      %cst_22 = arith.constant dense<0.000000e+00> : vector<8x128xf32>
      %38 = tpu.matmul %26, %37, %cst_22 {dimension_numbers = #tpu.dot_dimension_numbers<[1], [1], [0], [0], [0, 0, 1, 0], [], []>} : vector<8x32xf32>, vector<128x32xf32>, vector<8x128xf32> -> vector<8x128xf32>
      %c0_23 = arith.constant 0 : index
      %c0_24 = arith.constant 0 : index
      %39 = vector.load %arg5[%c0_23, %c0_24] : memref<8x128xf32, #tpu.memory_space<vmem>>, vector<8x128xf32>
      tpu.vector_store %arg5[%c0_23, %c0_24], %38 {strides = array<i32>} : memref<8x128xf32, #tpu.memory_space<vmem>>, vector<8x128xf32>,
    } else {
    }
    return
  }
  func.func @transform_0(%arg0: i32, %arg1: i32) -> (i32, i32) {
    %c0_i32 = arith.constant 0 : i32
    %c0_i32_0 = arith.constant 0 : i32
    %c0_i32_1 = arith.constant 0 : i32
    return %c0_i32, %c0_i32_0 : i32, i32
  }
  func.func @transform_1(%arg0: i32, %arg1: i32) -> (i32, i32) {
    %c0_i32 = arith.constant 0 : i32
    %c0_i32_0 = arith.constant 0 : i32
    %c0_i32_1 = arith.constant 0 : i32
    return %c0_i32, %c0_i32_0 : i32, i32
  }
  func.func @transform_2(%arg0: i32, %arg1: i32) -> (i32, i32, i32) {
    %c0_i32 = arith.constant 0 : i32
    %c0_i32_0 = arith.constant 0 : i32
    return %arg0, %arg1, %c0_i32 : i32, i32, i32
  }
  func.func @transform_3(%arg0: i32, %arg1: i32) -> (i32, i32) {
    %c0_i32 = arith.constant 0 : i32
    %c0_i32_0 = arith.constant 0 : i32
    return %arg0, %c0_i32 : i32, i32
  }
}

</mosaic_0001>

<llo_original>
// kernel: tpu_custom_call.1
$region0: #{tpu_custom_call.1}
  #allocation0 [shape = 'u32[]', space=smem, size = 0x4, offset = 0x4, fixed_abs, tag = 'smem constant byte address 0x4 - core index']
  #allocation1 [shape = 'u32[144,128]{1,0:T(1,128)}', space=vmem, size = 0x12000, scoped, tag = 'internal scratch']
  #allocation2 [shape = 'f32[8,32]{1,0:T(8,128)}', space=vmem, size = 0x1000, scoped, tag = 'scratch operand']
  #allocation3 [shape = 'f32[1,1]{1,0:T(1,128)S(6)}', space=smem, size = 0x200, scoped, tag = 'scoped memory for tpu_custom_call.1']
  %s0 = inlined_call_operand.<no memory space> [shape: f32[1,1], index: 0, kind: input, shape index: {}]
  %s1 = inlined_call_operand.vmem [shape: f32[128,32], index: 1, kind: input, shape index: {}]
  %s2 = inlined_call_operand.hbm [shape: f32[8,32,32], index: 2, kind: input, shape index: {}]
  %s3 = inlined_call_operand.hbm [shape: f32[8,128], index: 3, kind: output, shape index: {}]
  %s4 = sld [smem:[#allocation0]]
  $region34: #{tpu_custom_call.1} parent=0
    _
  %s6 = ssub.s32 1, %s4
  %s7 = scalar_select 0, %s6, %s4
  %8 = sst [smem:[#allocation3]] %s0
  $region1: #{tpu_custom_call.1} parent=0
    #allocation4 [shape = 'u8[131072]{0}', space=vmem, size = 0x20000, scoped, tag = 'input window, operand 2, single buffered']
    #allocation5 [shape = 's32[1]{0}', space=sflag, size = 0x4, scoped, tag = 'scoped memory for tpu_custom_call.1']
    #allocation6 [shape = 's32[1]{0}', space=sflag, size = 0x4, scoped, tag = 'scoped memory for tpu_custom_call.1']
    #allocation7 [shape = 'u8[4096]{0}', space=vmem, size = 0x1000, scoped, tag = 'output window, operand 0, single buffered']
    %9 = vsyncpa [#allocation5], 0
    %10 = vsyncpa [#allocation6], 0
    // Predicated region
    $region2: #{tpu_custom_call.1} parent=1 // pred_check
      _
    $region3: #{tpu_custom_call.1} parent=1 // pred_check_branch
      %12 = sbr.rel (0) target = $region5
    $region4: #{tpu_custom_call.1} parent=1 // pred_region
      _
    $region5: #{tpu_custom_call.1} parent=1 // pred_fallthru
      _
    // Predicated region
    $region6: #{tpu_custom_call.1} parent=1 // pred_check
      _
    $region7: #{tpu_custom_call.1} parent=1 // pred_check_branch
      %14 = sbr.rel (0) target = $region9
    $region8: #{tpu_custom_call.1} parent=1 // pred_region
      _
    $region9: #{tpu_custom_call.1} parent=1 // pred_fallthru
      _
    // Predicated region
    $region10: #{tpu_custom_call.1} parent=1 // pred_check
      _
    $region11: #{tpu_custom_call.1} parent=1 // pred_check_branch
      %16 = sbr.rel (0) target = $region13
    $region12: #{tpu_custom_call.1} parent=1 // pred_region
      %s18 = ssub.s32 4096, 4096
      %19 = vsyncadd [#allocation5], %s18
      %s20 = sshll.u32 [#allocation4], 4
      %s21 = int_to_ptr.vmem [resolvable:$true] %s20
      %26 = dma.hbm_to_vmem [thread:$0]  %s2, 4096, %s21, [#allocation5], 128, 128, 8
    $region13: #{tpu_custom_call.1} parent=1 // pred_fallthru
      _
    // Predicated region
    $region14: #{tpu_custom_call.1} parent=1 // pred_check
      _
    $region15: #{tpu_custom_call.1} parent=1 // pred_check_branch
      %28 = sbr.rel (0) target = $region17
    $region16: #{tpu_custom_call.1} parent=1 // pred_region
      %29 = dma.done [#allocation5], 4096
    $region17: #{tpu_custom_call.1} parent=1 // pred_fallthru
      _
    %p30 = scmp.eq.s32.totalorder 0, 0
    // Predicated region
    $region18: #{tpu_custom_call.1} parent=1 // pred_check
      %p31 = pneg %p30
    $region19: #{tpu_custom_call.1} parent=1 // pred_check_branch
      %33 = sbr.rel (%p31) target = $region21
    $region20: #{tpu_custom_call.1} parent=1 // pred_region
      %vm34 = vcmask 261120
      %35 = vst.msk [vmem:[#allocation2] sm:$0xff] %vm34, 0.0
    $region21: #{tpu_custom_call.1} parent=1 // pred_fallthru
      _
    %v36 = vld [vmem:[#allocation2] sm:$0xff]
    %v37 = vld [vmem:[#allocation4] sm:$0xff]
    %v38 = vld [vmem:[#allocation4 + $0x8] sm:$0xff]
    %v39 = vld [vmem:[#allocation4 + $0x10] sm:$0xff]
    %v40 = vld [vmem:[#allocation4 + $0x18] sm:$0xff]
    %v41 = vld [vmem:[#allocation4 + $0x20] sm:$0xff]
    %v42 = vld [vmem:[#allocation4 + $0x28] sm:$0xff]
    %v43 = vld [vmem:[#allocation4 + $0x30] sm:$0xff]
    %v44 = vld [vmem:[#allocation4 + $0x38] sm:$0xff]
    %v45 = vld [vmem:[#allocation4 + $0x40] sm:$0xff]
    %v46 = vld [vmem:[#allocation4 + $0x48] sm:$0xff]
    %v47 = vld [vmem:[#allocation4 + $0x50] sm:$0xff]
    %v48 = vld [vmem:[#allocation4 + $0x58] sm:$0xff]
    %v49 = vld [vmem:[#allocation4 + $0x60] sm:$0xff]
    %v50 = vld [vmem:[#allocation4 + $0x68] sm:$0xff]
    %v51 = vld [vmem:[#allocation4 + $0x70] sm:$0xff]
    %v52 = vld [vmem:[#allocation4 + $0x78] sm:$0xff]
    %v53 = vld [vmem:[#allocation4 + $0x80] sm:$0xff]
    %v54 = vld [vmem:[#allocation4 + $0x88] sm:$0xff]
    %v55 = vld [vmem:[#allocation4 + $0x90] sm:$0xff]
    %v56 = vld [vmem:[#allocation4 + $0x98] sm:$0xff]
    %v57 = vld [vmem:[#allocation4 + $0xa0] sm:$0xff]
    %v58 = vld [vmem:[#allocation4 + $0xa8] sm:$0xff]
    %v59 = vld [vmem:[#allocation4 + $0xb0] sm:$0xff]
    %v60 = vld [vmem:[#allocation4 + $0xb8] sm:$0xff]
    %v61 = vld [vmem:[#allocation4 + $0xc0] sm:$0xff]
    %v62 = vld [vmem:[#allocation4 + $0xc8] sm:$0xff]
    %v63 = vld [vmem:[#allocation4 + $0xd0] sm:$0xff]
    %v64 = vld [vmem:[#allocation4 + $0xd8] sm:$0xff]
    %v65 = vld [vmem:[#allocation4 + $0xe0] sm:$0xff]
    %v66 = vld [vmem:[#allocation4 + $0xe8] sm:$0xff]
    %v67 = vld [vmem:[#allocation4 + $0xf0] sm:$0xff]
    %v68 = vld [vmem:[#allocation4 + $0xf8] sm:$0xff]
    %vm69 = vcmask 261120
    %v70 = vsel %vm69, %v37, 0.0
    %v71 = vsel %vm69, %v38, 0.0
    %v72 = vadd.f32 %v70, %v71
    %v73 = vsel %vm69, %v39, 0.0
    %v74 = vadd.f32 %v72, %v73
    %v75 = vsel %vm69, %v40, 0.0
    %v76 = vadd.f32 %v74, %v75
    %v77 = vrot.slane %v76, 4
    %v78 = vadd.f32 %v76, %v77
    %v79 = vrot.slane %v78, 2
    %v80 = vadd.f32 %v78, %v79
    %v81 = vrot.slane %v80, 1
    %v82 = vadd.f32 %v80, %v81
    %v83 = vsel %vm69, %v41, 0.0
    %v84 = vsel %vm69, %v42, 0.0
    %v85 = vadd.f32 %v83, %v84
    %v86 = vsel %vm69, %v43, 0.0
    %v87 = vadd.f32 %v85, %v86
    %v88 = vsel %vm69, %v44, 0.0
    %v89 = vadd.f32 %v87, %v88
    %v90 = vrot.slane %v89, 4
    %v91 = vadd.f32 %v89, %v90
    %v92 = vrot.slane %v91, 2
    %v93 = vadd.f32 %v91, %v92
    %v94 = vrot.slane %v93, 1
    %v95 = vadd.f32 %v93, %v94
    %v96 = vsel %vm69, %v45, 0.0
    %v97 = vsel %vm69, %v46, 0.0
    %v98 = vadd.f32 %v96, %v97
    %v99 = vsel %vm69, %v47, 0.0
    %v100 = vadd.f32 %v98, %v99
    %v101 = vsel %vm69, %v48, 0.0
    %v102 = vadd.f32 %v100, %v101
    %v103 = vrot.slane %v102, 4
    %v104 = vadd.f32 %v102, %v103
    %v105 = vrot.slane %v104, 2
    %v106 = vadd.f32 %v104, %v105
    %v107 = vrot.slane %v106, 1
    %v108 = vadd.f32 %v106, %v107
    %v109 = vsel %vm69, %v49, 0.0
    %v110 = vsel %vm69, %v50, 0.0
    %v111 = vadd.f32 %v109, %v110
    %v112 = vsel %vm69, %v51, 0.0
    %v113 = vadd.f32 %v111, %v112
    %v114 = vsel %vm69, %v52, 0.0
    %v115 = vadd.f32 %v113, %v114
    %v116 = vrot.slane %v115, 4
    %v117 = vadd.f32 %v115, %v116
    %v118 = vrot.slane %v117, 2
    %v119 = vadd.f32 %v117, %v118
    %v120 = vrot.slane %v119, 1
    %v121 = vadd.f32 %v119, %v120
    %v122 = vsel %vm69, %v53, 0.0
    %v123 = vsel %vm69, %v54, 0.0
    %v124 = vadd.f32 %v122, %v123
    %v125 = vsel %vm69, %v55, 0.0
    %v126 = vadd.f32 %v124, %v125
    %v127 = vsel %vm69, %v56, 0.0
    %v128 = vadd.f32 %v126, %v127
    %v129 = vrot.slane %v128, 4
    %v130 = vadd.f32 %v128, %v129
    %v131 = vrot.slane %v130, 2
    %v132 = vadd.f32 %v130, %v131
    %v133 = vrot.slane %v132, 1
    %v134 = vadd.f32 %v132, %v133
    %v135 = vsel %vm69, %v57, 0.0
    %v136 = vsel %vm69, %v58, 0.0
    %v137 = vadd.f32 %v135, %v136
    %v138 = vsel %vm69, %v59, 0.0
    %v139 = vadd.f32 %v137, %v138
    %v140 = vsel %vm69, %v60, 0.0
    %v141 = vadd.f32 %v139, %v140
    %v142 = vrot.slane %v141, 4
    %v143 = vadd.f32 %v141, %v142
    %v144 = vrot.slane %v143, 2
    %v145 = vadd.f32 %v143, %v144
    %v146 = vrot.slane %v145, 1
    %v147 = vadd.f32 %v145, %v146
    %v148 = vsel %vm69, %v61, 0.0
    %v149 = vsel %vm69, %v62, 0.0
    %v150 = vadd.f32 %v148, %v149
    %v151 = vsel %vm69, %v63, 0.0
    %v152 = vadd.f32 %v150, %v151
    %v153 = vsel %vm69, %v64, 0.0
    %v154 = vadd.f32 %v152, %v153
    %v155 = vrot.slane %v154, 4
    %v156 = vadd.f32 %v154, %v155
    %v157 = vrot.slane %v156, 2
    %v158 = vadd.f32 %v156, %v157
    %v159 = vrot.slane %v158, 1
    %v160 = vadd.f32 %v158, %v159
    %v161 = vsel %vm69, %v65, 0.0
    %v162 = vsel %vm69, %v66, 0.0
    %v163 = vadd.f32 %v161, %v162
    %v164 = vsel %vm69, %v67, 0.0
    %v165 = vadd.f32 %v163, %v164
    %v166 = vsel %vm69, %v68, 0.0
    %v167 = vadd.f32 %v165, %v166
    %v168 = vrot.slane %v167, 4
    %v169 = vadd.f32 %v167, %v168
    %v170 = vrot.slane %v169, 2
    %v171 = vadd.f32 %v169, %v170
    %v172 = vrot.slane %v171, 1
    %v173 = vadd.f32 %v171, %v172
    %vm182 = vcmask 1041409
    %v183 = vsel %vm182, %v95, %v82
    %vm184 = vcmask 1042434
    %v185 = vsel %vm184, %v108, %v183
    %vm186 = vcmask 1043459
    %v187 = vsel %vm186, %v121, %v185
    %vm188 = vcmask 1044484
    %v189 = vsel %vm188, %v134, %v187
    %vm190 = vcmask 1045509
    %v191 = vsel %vm190, %v147, %v189
    %vm192 = vcmask 1046534
    %v193 = vsel %vm192, %v160, %v191
    %vm194 = vcmask 1047559
    %v195 = vsel %vm194, %v173, %v193
    %v197 = vadd.f32 %v36, %v195
    %198 = vst.msk [vmem:[#allocation2] sm:$0xff] %vm69, %v197
    // Predicated region
    $region22: #{tpu_custom_call.1} parent=1 // pred_check
      %p199 = pneg %p30
    $region23: #{tpu_custom_call.1} parent=1 // pred_check_branch
      %201 = sbr.rel (%p199) target = $region25
    $region24: #{tpu_custom_call.1} parent=1 // pred_region
      %v202 = vld [vmem:[#allocation2] sm:$0xff]
      %v203 = vmul.f32 %v202, 0.03125
      %v204 = vmul.f32 %v203, %v203
      %v205 = vsel %vm69, %v204, 0.0
      %206 = vadd.xlane.f32.xlu0 %v205
      %v207 = vpop.xlane.xlu0 %206
      %vm208 = vcmp.gt.f32.partialorder %v207, 0.0
      %v209 = vrsqrt.pop %v207
      %v210 = vsel %vm208, %v209, 0.0
      %s211 = sld [smem:[#allocation3]]
      %v212 = vstv %s211
      %v213 = vmul.f32 %v210, %v212
      %v214 = vmul.f32 %v203, %v213
      %v215 = vld [vmem:[%s1] sm:$0xff]
      %v216 = vld [vmem:[%s1 + $0x8] sm:$0xff]
      %v217 = vld [vmem:[%s1 + $0x10] sm:$0xff]
      %v218 = vld [vmem:[%s1 + $0x18] sm:$0xff]
      %v219 = vld [vmem:[%s1 + $0x20] sm:$0xff]
      %v220 = vld [vmem:[%s1 + $0x28] sm:$0xff]
      %v221 = vld [vmem:[%s1 + $0x30] sm:$0xff]
      %v222 = vld [vmem:[%s1 + $0x38] sm:$0xff]
      %v223 = vld [vmem:[%s1 + $0x40] sm:$0xff]
      %v224 = vld [vmem:[%s1 + $0x48] sm:$0xff]
      %v225 = vld [vmem:[%s1 + $0x50] sm:$0xff]
      %v226 = vld [vmem:[%s1 + $0x58] sm:$0xff]
      %v227 = vld [vmem:[%s1 + $0x60] sm:$0xff]
      %v228 = vld [vmem:[%s1 + $0x68] sm:$0xff]
      %v229 = vld [vmem:[%s1 + $0x70] sm:$0xff]
      %v230 = vld [vmem:[%s1 + $0x78] sm:$0xff]
      %v231 = vmul.f32 %v215, %v215
      %v232 = vmul.f32 %v216, %v216
      %v233 = vmul.f32 %v217, %v217
      %v234 = vmul.f32 %v218, %v218
      %v235 = vmul.f32 %v219, %v219
      %v236 = vmul.f32 %v220, %v220
      %v237 = vmul.f32 %v221, %v221
      %v238 = vmul.f32 %v222, %v222
      %v239 = vmul.f32 %v223, %v223
      %v240 = vmul.f32 %v224, %v224
      %v241 = vmul.f32 %v225, %v225
      %v242 = vmul.f32 %v226, %v226
      %v243 = vmul.f32 %v227, %v227
      %v244 = vmul.f32 %v228, %v228
      %v245 = vmul.f32 %v229, %v229
      %v246 = vmul.f32 %v230, %v230
      %v247 = vsel %vm69, %v231, 0.0
      %248 = vadd.xlane.f32.xlu0 %v247
      %v249 = vpop.xlane.xlu0 %248
      %v250 = vsel %vm69, %v232, 0.0
      %251 = vadd.xlane.f32.xlu0 %v250
      %v252 = vpop.xlane.xlu0 %251
      %v253 = vsel %vm69, %v233, 0.0
      %254 = vadd.xlane.f32.xlu0 %v253
      %v255 = vpop.xlane.xlu0 %254
      %v256 = vsel %vm69, %v234, 0.0
      %257 = vadd.xlane.f32.xlu0 %v256
      %v258 = vpop.xlane.xlu0 %257
      %v259 = vsel %vm69, %v235, 0.0
      %260 = vadd.xlane.f32.xlu0 %v259
      %v261 = vpop.xlane.xlu0 %260
      %v262 = vsel %vm69, %v236, 0.0
      %263 = vadd.xlane.f32.xlu0 %v262
      %v264 = vpop.xlane.xlu0 %263
      %v265 = vsel %vm69, %v237, 0.0
      %266 = vadd.xlane.f32.xlu0 %v265
      %v267 = vpop.xlane.xlu0 %266
      %v268 = vsel %vm69, %v238, 0.0
      %269 = vadd.xlane.f32.xlu0 %v268
      %v270 = vpop.xlane.xlu0 %269
      %v271 = vsel %vm69, %v239, 0.0
      %272 = vadd.xlane.f32.xlu0 %v271
      %v273 = vpop.xlane.xlu0 %272
      %v274 = vsel %vm69, %v240, 0.0
      %275 = vadd.xlane.f32.xlu0 %v274
      %v276 = vpop.xlane.xlu0 %275
      %v277 = vsel %vm69, %v241, 0.0
      %278 = vadd.xlane.f32.xlu0 %v277
      %v279 = vpop.xlane.xlu0 %278
      %v280 = vsel %vm69, %v242, 0.0
      %281 = vadd.xlane.f32.xlu0 %v280
      %v282 = vpop.xlane.xlu0 %281
      %v283 = vsel %vm69, %v243, 0.0
      %284 = vadd.xlane.f32.xlu0 %v283
      %v285 = vpop.xlane.xlu0 %284
      %v286 = vsel %vm69, %v244, 0.0
      %287 = vadd.xlane.f32.xlu0 %v286
      %v288 = vpop.xlane.xlu0 %287
      %v289 = vsel %vm69, %v245, 0.0
      %290 = vadd.xlane.f32.xlu0 %v289
      %v291 = vpop.xlane.xlu0 %290
      %v292 = vsel %vm69, %v246, 0.0
      %293 = vadd.xlane.f32.xlu0 %v292
      %v294 = vpop.xlane.xlu0 %293
      %vm295 = vcmp.gt.f32.partialorder %v249, 0.0
      %vm296 = vcmp.gt.f32.partialorder %v252, 0.0
      %vm297 = vcmp.gt.f32.partialorder %v255, 0.0
      %vm298 = vcmp.gt.f32.partialorder %v258, 0.0
      %vm299 = vcmp.gt.f32.partialorder %v261, 0.0
      %vm300 = vcmp.gt.f32.partialorder %v264, 0.0
      %vm301 = vcmp.gt.f32.partialorder %v267, 0.0
      %vm302 = vcmp.gt.f32.partialorder %v270, 0.0
      %vm303 = vcmp.gt.f32.partialorder %v273, 0.0
      %vm304 = vcmp.gt.f32.partialorder %v276, 0.0
      %vm305 = vcmp.gt.f32.partialorder %v279, 0.0
      %vm306 = vcmp.gt.f32.partialorder %v282, 0.0
      %vm307 = vcmp.gt.f32.partialorder %v285, 0.0
      %vm308 = vcmp.gt.f32.partialorder %v288, 0.0
      %vm309 = vcmp.gt.f32.partialorder %v291, 0.0
      %vm310 = vcmp.gt.f32.partialorder %v294, 0.0
      %v311 = vrsqrt.pop %v249
      %v312 = vrsqrt.pop %v252
      %v313 = vrsqrt.pop %v255
      %v314 = vrsqrt.pop %v258
      %v315 = vrsqrt.pop %v261
      %v316 = vrsqrt.pop %v264
      %v317 = vrsqrt.pop %v267
      %v318 = vrsqrt.pop %v270
      %v319 = vrsqrt.pop %v273
      %v320 = vrsqrt.pop %v276
      %v321 = vrsqrt.pop %v279
      %v322 = vrsqrt.pop %v282
      %v323 = vrsqrt.pop %v285
      %v324 = vrsqrt.pop %v288
      %v325 = vrsqrt.pop %v291
      %v326 = vrsqrt.pop %v294
      %v327 = vsel %vm295, %v311, 0.0
      %v328 = vsel %vm296, %v312, 0.0
      %v329 = vsel %vm297, %v313, 0.0
      %v330 = vsel %vm298, %v314, 0.0
      %v331 = vsel %vm299, %v315, 0.0
      %v332 = vsel %vm300, %v316, 0.0
      %v333 = vsel %vm301, %v317, 0.0
      %v334 = vsel %vm302, %v318, 0.0
      %v335 = vsel %vm303, %v319, 0.0
      %v336 = vsel %vm304, %v320, 0.0
      %v337 = vsel %vm305, %v321, 0.0
      %v338 = vsel %vm306, %v322, 0.0
      %v339 = vsel %vm307, %v323, 0.0
      %v340 = vsel %vm308, %v324, 0.0
      %v341 = vsel %vm309, %v325, 0.0
      %v342 = vsel %vm310, %v326, 0.0
      %v343 = vmul.f32 %v215, %v327
      %v344 = vmul.f32 %v216, %v328
      %v345 = vmul.f32 %v217, %v329
      %v346 = vmul.f32 %v218, %v330
      %v347 = vmul.f32 %v219, %v331
      %v348 = vmul.f32 %v220, %v332
      %v349 = vmul.f32 %v221, %v333
      %v350 = vmul.f32 %v222, %v334
      %v351 = vmul.f32 %v223, %v335
      %v352 = vmul.f32 %v224, %v336
      %v353 = vmul.f32 %v225, %v337
      %v354 = vmul.f32 %v226, %v338
      %v355 = vmul.f32 %v227, %v339
      %v356 = vmul.f32 %v228, %v340
      %v357 = vmul.f32 %v229, %v341
      %v358 = vmul.f32 %v230, %v342
      %v360 = vsel %vm69, %v214, 0
      %v363 = vsel %vm69, %v343, 0
      %v366 = vsel %vm69, %v344, 0
      %v369 = vsel %vm69, %v345, 0
      %v372 = vsel %vm69, %v346, 0
      %v375 = vsel %vm69, %v347, 0
      %v378 = vsel %vm69, %v348, 0
      %v381 = vsel %vm69, %v349, 0
      %v384 = vsel %vm69, %v350, 0
      %v387 = vsel %vm69, %v351, 0
      %v390 = vsel %vm69, %v352, 0
      %v393 = vsel %vm69, %v353, 0
      %v396 = vsel %vm69, %v354, 0
      %v399 = vsel %vm69, %v355, 0
      %v402 = vsel %vm69, %v356, 0
      %v405 = vsel %vm69, %v357, 0
      %v408 = vsel %vm69, %v358, 0
      %410 = vmatprep.subr.mxu0 0.0
      %411 = vmatpush1.xpose.msra.mxu0 %v363
      %412 = vmatprep.subr.mxu0 0.0
      %413 = vmatpush1.xpose.msra.mxu0 %v366
      %414 = vmatprep.subr.mxu0 0.0
      %415 = vmatpush1.xpose.msra.mxu0 %v369
      %416 = vmatprep.subr.mxu0 0.0
      %417 = vmatpush1.xpose.msra.mxu0 %v372
      %418 = vmatprep.subr.mxu0 0.0
      %419 = vmatpush1.xpose.msra.mxu0 %v375
      %420 = vmatprep.subr.mxu0 0.0
      %421 = vmatpush1.xpose.msra.mxu0 %v378
      %422 = vmatprep.subr.mxu0 0.0
      %423 = vmatpush1.xpose.msra.mxu0 %v381
      %424 = vmatprep.subr.mxu0 0.0
      %425 = vmatpush1.xpose.msra.mxu0 %v384
      %426 = vmatprep.subr.mxu0 0.0
      %427 = vmatpush1.xpose.msra.mxu0 %v387
      %428 = vmatprep.subr.mxu0 0.0
      %429 = vmatpush1.xpose.msra.mxu0 %v390
      %430 = vmatprep.subr.mxu0 0.0
      %431 = vmatpush1.xpose.msra.mxu0 %v393
      %432 = vmatprep.subr.mxu0 0.0
      %433 = vmatpush1.xpose.msra.mxu0 %v396
      %434 = vmatprep.subr.mxu0 0.0
      %435 = vmatpush1.xpose.msra.mxu0 %v399
      %436 = vmatprep.subr.mxu0 0.0
      %437 = vmatpush1.xpose.msra.mxu0 %v402
      %438 = vmatprep.subr.mxu0 0.0
      %439 = vmatpush1.xpose.msra.mxu0 %v405
      %440 = vmatprep.subr.mxu0 0.0
      %441 = vmatpush1.xpose.msra.mxu0 %v408
      %442 = vmatprep.subr.mxu0 0.0
      %443 = vmatpush1.xpose.msra.mxu0 0.0
      %444 = vmatprep.subr.mxu0 0.0
      %445 = vmatpush1.xpose.msra.mxu0 0.0
      %446 = vmatprep.subr.mxu0 0.0
      %447 = vmatpush1.xpose.msra.mxu0 0.0
      %448 = vmatprep.subr.mxu0 0.0
      %449 = vmatpush1.xpose.msra.mxu0 0.0
      %450 = vmatprep.subr.mxu0 0.0
      %451 = vmatpush1.xpose.msra.mxu0 0.0
      %452 = vmatprep.subr.mxu0 0.0
      %453 = vmatpush1.xpose.msra.mxu0 0.0
      %454 = vmatprep.subr.mxu0 0.0
      %455 = vmatpush1.xpose.msra.mxu0 0.0
      %456 = vmatprep.subr.mxu0 0.0
      %457 = vmatpush1.xpose.msra.mxu0 0.0
      %458 = vmatprep.subr.mxu0 0.0
      %459 = vmatpush1.xpose.msra.mxu0 0.0
      %460 = vmatprep.subr.mxu0 0.0
      %461 = vmatpush1.xpose.msra.mxu0 0.0
      %462 = vmatprep.subr.mxu0 0.0
      %463 = vmatpush1.xpose.msra.mxu0 0.0
      %464 = vmatprep.subr.mxu0 0.0
      %465 = vmatpush1.xpose.msra.mxu0 0.0
      %466 = vmatprep.subr.mxu0 0.0
      %467 = vmatpush1.xpose.msra.mxu0 0.0
      %468 = vmatprep.subr.mxu0 0.0
      %469 = vmatpush1.xpose.msra.mxu0 0.0
      %470 = vmatprep.subr.mxu0 0.0
      %471 = vmatpush1.xpose.msra.mxu0 0.0
      %472 = vmatprep.subr.mxu0 0.0
      %473 = vmatpush1.xpose.msra.mxu0 0.0
      %474 = vmatprep.mubr.f32.mxu0 0.0
      %475 = vmatmul.mubr.f32.gmra.mrb[0].mxu0 %v360
      %v476 = vpop.f32.mrb[0].mxu0
      %v477 = vadd.f32 0.0, %v476
      %v478 = vpop.f32.mrb[0].mxu0
      %479 = vdwg.mxu0
      %480 = vst [vmem:[#allocation7] sm:$0xff] %v477
    $region25: #{tpu_custom_call.1} parent=1 // pred_fallthru
      _
    // Predicated region
    $region26: #{tpu_custom_call.1} parent=1 // pred_check
      _
    $region27: #{tpu_custom_call.1} parent=1 // pred_check_branch
      %482 = sbr.rel (0) target = $region29
    $region28: #{tpu_custom_call.1} parent=1 // pred_region
      %s484 = ssub.s32 128, 128
      %485 = vsyncadd [#allocation6], %s484
      %s487 = sshll.u32 [#allocation7], 4
      %s488 = int_to_ptr.vmem [resolvable:$true] %s487
      %490 = dma.vmem_to_hbm [thread:$0]  %s488, 128, %s3, [#allocation6]
    $region29: #{tpu_custom_call.1} parent=1 // pred_fallthru
      _
    // Predicated region
    $region30: #{tpu_custom_call.1} parent=1 // pred_check
      _
    $region31: #{tpu_custom_call.1} parent=1 // pred_check_branch
      %492 = sbr.rel (0) target = $region33
    $region32: #{tpu_custom_call.1} parent=1 // pred_region
      %493 = dma.done [#allocation6], 128
    $region33: #{tpu_custom_call.1} parent=1 // pred_fallthru
      _
    %494 = vsyncpa [#allocation5], 1
    %495 = vsyncpa [#allocation6], 1

</llo_original>
